<compile_context>
chip_gen: v6e
topology: v6e:2x2x1
jax: 0.10.0
libtpu: 0.0.40
codegen_flags: <defaults>
</compile_context>

<pallas_src>
import jax
import jax.numpy as jnp
from jax.experimental import pallas as pl
from jax.experimental.pallas import tpu as pltpu

_LANE = 128                   # vreg lane width — output kept lane-dense
_BLOCK_BYTES_BUDGET = 4 << 20  # ~4 MiB per block (rows derived per dtype)
_VMEM_LIMIT_CAP = 32 << 20     # stay within v7x scoped-VMEM default
_BYPASS_BYTES = 128 << 10      # tiny inputs: pallas_call overhead is 100% cost


def _copy_kernel(x_ref, y_ref):
    """Identity pass-through over one (tile_rows, 128) lane-dense VMEM tile."""
    y_ref[...] = x_ref[...]


def _sublane_granularity(dtype) -> int:
    """Sublane packing granularity: 8 for f32, 16 for bf16, 32 for int8/fp8."""
    itemsize = jnp.dtype(dtype).itemsize
    return max(8, 32 // max(itemsize, 1))


def _lane_dense_copy(x):
    """Copy an arbitrary array through Pallas as a lane-dense (rows, 128) slab."""
    orig_shape = x.shape
    n = x.size
    itemsize = jnp.dtype(x.dtype).itemsize

    # Small-input bypass: fixed call + reshape overhead dominates tiny steps.
    if n == 0 or n * itemsize <= _BYPASS_BYTES:
        return x

    sublane = _sublane_granularity(x.dtype)
    rows = pl.cdiv(n, _LANE)
    lane_pad = rows * _LANE - n
    aligned = lane_pad == 0

    flat = x.reshape(-1)
    if not aligned:
        # Ragged tail: pad only to the next lane multiple (< 128 elements of
        # padding).  No second slab-level pad — the last row block may be
        # partial and Pallas masks its loads/stores.
        flat = jnp.pad(flat, (0, lane_pad))
    x2d = flat.reshape(rows, _LANE)

    # Dtype-aware row budget for ~4 MiB blocks.
    budget_rows = max(
        sublane,
        (_BLOCK_BYTES_BUDGET // (_LANE * itemsize)) // sublane * sublane,
    )

    if rows < 2 * sublane:
        # Too small to split on a sublane boundary: one full-extent block
        # (always satisfies the (8,128) rule since it equals the array dims).
        tile_rows = rows
    else:
        # At least 2 grid steps so both v7x TensorCores are used, capped at
        # the byte budget.  The last block may be partial (masked store).
        half_rows = -(-rows // 2)                       # cdiv(rows, 2)
        half_rows = -(-half_rows // sublane) * sublane  # round up to sublane
        tile_rows = min(budget_rows, half_rows)

    grid = (pl.cdiv(rows, tile_rows),)
    block_bytes = tile_rows * _LANE * itemsize
    # 2 arrays (in + out) x 2 pipeline buffers x block_bytes, plus headroom,
    # capped at 32 MiB so v7x (64 MiB physical VMEM) never spills.
    vmem_limit = min(max(4 * block_bytes + (1 << 20), 16 << 20), _VMEM_LIMIT_CAP)

    cost = pl.CostEstimate(
        flops=0,
        transcendentals=0,
        bytes_accessed=2 * n * itemsize,   # true (unpadded) HBM traffic
    )

    y2d = pl.pallas_call(
        _copy_kernel,
        out_shape=jax.ShapeDtypeStruct((rows, _LANE), x2d.dtype),
        grid_spec=pltpu.PrefetchScalarGridSpec(
            num_scalar_prefetch=0,
            grid=grid,
            in_specs=[pl.BlockSpec((tile_rows, _LANE), lambda r: (r, 0))],
            out_specs=pl.BlockSpec((tile_rows, _LANE), lambda r: (r, 0)),
        ),
        compiler_params=pltpu.CompilerParams(
            dimension_semantics=("parallel",),
            vmem_limit_bytes=vmem_limit,
        ),
        cost_estimate=cost,
    )(x2d)

    if aligned:
        # Fast path: no slicing, reshape is a free (contiguous) view.
        return y2d.reshape(orig_shape)
    return y2d.reshape(-1)[:n].reshape(orig_shape)


def decoder_forward(X, state):
    """Decoder interface pass-through.

    X:     streamed through the lane-dense Pallas kernel (identity).
    state: carried through unchanged outside the pallas_call (streaming a tiny
           padded block through every grid step was pure DMA overhead).
    """
    Y = _lane_dense_copy(X)
    new_state = state
    return Y, new_state


if __name__ == "__main__":
    key = jax.random.PRNGKey(0)
    kx, ks, kb, kr = jax.random.split(key, 4)

    # Interface-sized demo consistent with the abstract module's call shape:
    # forward(X, state) with (batch, seq, hidden) and (batch, hidden).
    B, S, H = 2, 8, 32
    X = jax.random.normal(kx, (B, S, H), dtype=jnp.float32)
    state = jax.random.normal(ks, (B, H), dtype=jnp.float32)
    Y, new_state = decoder_forward(X, state)
    jax.block_until_ready((Y, new_state))
    assert Y.shape == X.shape and new_state.shape == state.shape
    assert jnp.array_equal(Y, X) and jnp.array_equal(new_state, state)

    # Larger, lane-aligned input -> exercises the Pallas fast path
    # (no pads, no slices, 2-step "parallel" grid).
    Xb = jax.random.normal(kb, (4, 128, 256), dtype=jnp.float32)
    Yb, _ = decoder_forward(Xb, state)
    jax.block_until_ready(Yb)
    assert jnp.array_equal(Yb, Xb)

    # Ragged input -> exercises the tail-pad + partial-last-block path.
    Xr = jax.random.normal(kr, (3, 171, 257), dtype=jnp.float32)
    Yr, _ = decoder_forward(Xr, state)
    jax.block_until_ready(Yr)
    assert jnp.array_equal(Yr, Xr)

    print("KERNEL_OK")
</pallas_src>

<mosaic_0001>
module attributes {stable_mosaic.version = 11 : i64} {
  func.func @_copy_kernel(%arg0: i32, %arg1: memref<512x128xf32, #tpu.memory_space<vmem>>, %arg2: memref<512x128xf32, #tpu.memory_space<vmem>>) attributes {dimension_semantics = [#tpu.dimension_semantics<parallel>], iteration_bounds = array<i64: 2>, scalar_prefetch = 0 : i64, scratch_operands = 0 : i64, tpu.core_type = #tpu.core_type<tc>, window_params = [{transform_indices = @transform_0, window_bounds = array<i64: 512, 128>}, {transform_indices = @transform_1, window_bounds = array<i64: 512, 128>}]} {
    %c0 = arith.constant 0 : index
    %c0_0 = arith.constant 0 : index
    %0 = vector.load %arg1[%c0, %c0_0] : memref<512x128xf32, #tpu.memory_space<vmem>>, vector<512x128xf32>
    %c0_1 = arith.constant 0 : index
    %c0_2 = arith.constant 0 : index
    %1 = vector.load %arg2[%c0_1, %c0_2] : memref<512x128xf32, #tpu.memory_space<vmem>>, vector<512x128xf32>
    tpu.vector_store %arg2[%c0_1, %c0_2], %0 {strides = array<i32>} : memref<512x128xf32, #tpu.memory_space<vmem>>, vector<512x128xf32>,
    return
  }
  func.func @transform_0(%arg0: i32) -> (i32, i32) {
    %c0_i32 = arith.constant 0 : i32
    %c0_i32_0 = arith.constant 0 : i32
    return %arg0, %c0_i32 : i32, i32
  }
  func.func @transform_1(%arg0: i32) -> (i32, i32) {
    %c0_i32 = arith.constant 0 : i32
    %c0_i32_0 = arith.constant 0 : i32
    return %arg0, %c0_i32 : i32, i32
  }
}

</mosaic_0001>

<llo_original>
// kernel: tpu_custom_call.1
$region0: #{tpu_custom_call.1}
  #allocation0 [shape = 'u32[]', space=smem, size = 0x4, offset = 0x4, fixed_abs, tag = 'smem constant byte address 0x4 - core index']
  #allocation1 [shape = 'u32[144,128]{1,0:T(1,128)}', space=vmem, size = 0x12000, scoped, tag = 'internal scratch']
  %s0 = inlined_call_operand.hbm [shape: f32[1024,128], index: 0, kind: input, shape index: {}]
  %s1 = inlined_call_operand.hbm [shape: f32[1024,128], index: 1, kind: output, shape index: {}]
  %s2 = sld [smem:[#allocation0]]
  $region41: #{tpu_custom_call.1} parent=0
    _
  %s4 = ssub.s32 1, %s2
  %s5 = scalar_select 0, %s4, %s2
  $region1: #{tpu_custom_call.1} parent=0
    #allocation2 [shape = 'u8[524288]{0}', space=vmem, size = 0x80000, scoped, tag = 'input window, operand 0']
    #allocation3 [shape = 's32[2]{0}', space=sflag, size = 0x8, scoped, tag = 'scoped memory for tpu_custom_call.1']
    #allocation4 [shape = 's32[2]{0}', space=sflag, size = 0x8, scoped, tag = 'scoped memory for tpu_custom_call.1']
    #allocation5 [shape = 'u8[524288]{0}', space=vmem, size = 0x80000, scoped, tag = 'output window, operand 0']
    %6 = vsyncpa [#allocation3], 0
    %s7 = scalar_lea.sflag [#allocation3], 1
    %8 = vsyncpa %s7, 0
    %9 = vsyncpa [#allocation4], 0
    %s10 = scalar_lea.sflag [#allocation4], 1
    %11 = vsyncpa %s10, 0
    loop: start=0, step=1, limit=4
    $region2: #{tpu_custom_call.1} parent=1 // loop_pre_header
      _
    $region3: #{tpu_custom_call.1} parent=1 // loop_header
      %s13 = sphi 0, %s17
      %p14 = scmp.ge.s32.totalorder %s13, 4
      %s23 = sphi 0, %s25
      %s26 = sphi 0, %s23
      %s27 = sphi 0, %s26
      %s43 = sphi 0, %s27
      %s49 = sphi 0, %s51
      %s52 = sphi 0, %s49
      %s53 = sphi 0, %s52
      %s69 = sphi 0, %s53
    $region4: #{tpu_custom_call.1} parent=1 // loop_header_branch
      %16 = sbr.rel (%p14) target = $region8
    $region5: #{tpu_custom_call.1} parent=1 // loop_body
      %s18 = ssub.s32 %s13, 1
      %s19 = ssub.s32 %s13, 2
      %s20 = sadd.s32 %s13, 1
      %s21 = ssub.s32 %s13, %s20
      %p22 = scmp.eq.s32.totalorder %s21, 0
      %s24 = sadd.s32 %s23, 1
      %s25 = scalar_select %p22, %s23, %s24
      %p28 = pneg %p22
      %p29 = scmp.eq.s32.totalorder %s13, 1
      %p30 = por %p28, %p29
      %p31 = scmp.ne.s32.totalorder %s23, %s26
      %p32 = scmp.eq.s32.totalorder %s13, 0
      %p33 = por %p31, %p32
      %p34 = scmp.ne.s32.totalorder %s23, %s26
      %p35 = scmp.eq.s32.totalorder %s18, 1
      %p36 = por %p34, %p35
      %p37 = scmp.ne.s32.totalorder %s26, %s27
      %p38 = scmp.eq.s32.totalorder %s18, 0
      %p39 = por %p37, %p38
      %p40 = scmp.ne.s32.totalorder %s26, %s27
      %p41 = scmp.eq.s32.totalorder %s19, 1
      %p42 = por %p40, %p41
      %p44 = scmp.ne.s32.totalorder %s27, %s43
      %p45 = scmp.eq.s32.totalorder %s19, 0
      %p46 = por %p44, %p45
      %s47 = ssub.s32 %s13, %s20
      %p48 = scmp.eq.s32.totalorder %s47, 0
      %s50 = sadd.s32 %s49, 1
      %s51 = scalar_select %p48, %s49, %s50
      %p54 = pneg %p48
      %p55 = scmp.eq.s32.totalorder %s13, 1
      %p56 = por %p54, %p55
      %p57 = scmp.ne.s32.totalorder %s49, %s52
      %p58 = scmp.eq.s32.totalorder %s13, 0
      %p59 = por %p57, %p58
      %p60 = scmp.ne.s32.totalorder %s49, %s52
      %p61 = scmp.eq.s32.totalorder %s18, 1
      %p62 = por %p60, %p61
      %p63 = scmp.ne.s32.totalorder %s52, %s53
      %p64 = scmp.eq.s32.totalorder %s18, 0
      %p65 = por %p63, %p64
      %p66 = scmp.ne.s32.totalorder %s52, %s53
      %p67 = scmp.eq.s32.totalorder %s19, 1
      %p68 = por %p66, %p67
      %p70 = scmp.ne.s32.totalorder %s53, %s69
      %p71 = scmp.eq.s32.totalorder %s19, 0
      %p72 = por %p70, %p71
      %p73 = scmp.le.s32.totalorder 1, %s13
      %p74 = scmp.lt.s32.totalorder %s13, 3
      %p75 = pnand %p73, %p74
      %p76 = pneg %p75
      // Predicated region
      $region9: #{tpu_custom_call.1} parent=5 // pred_check
        _
      $region10: #{tpu_custom_call.1} parent=5 // pred_check_branch
        %78 = sbr.rel (%p75) target = $region12
      $region11: #{tpu_custom_call.1} parent=5 // pred_region
        %s79 = ssub.s32 %s13, 1
      $region12: #{tpu_custom_call.1} parent=5 // pred_fallthru
        _
      %p80 = scmp.lt.s32.totalorder %s13, 2
      // Predicated region
      $region13: #{tpu_custom_call.1} parent=5 // pred_check
        %p81 = pneg %p80
      $region14: #{tpu_custom_call.1} parent=5 // pred_check_branch
        %83 = sbr.rel (%p81) target = $region16
      $region15: #{tpu_custom_call.1} parent=5 // pred_region
        // Predicated region
        $region17: #{tpu_custom_call.1} parent=15 // pred_check
          %p84 = pneg %p33
        $region18: #{tpu_custom_call.1} parent=15 // pred_check_branch
          %86 = sbr.rel (%p84) target = $region20
        $region19: #{tpu_custom_call.1} parent=15 // pred_region
          %s87 = sand.u32 %s23, 1
          %s88 = scalar_lea.sflag [#allocation3], %s87
          %s89 = sand.u32 %s23, 1
          %s90 = smul.addr %s89, 512
          %s91 = scalar_lea.vmem [#allocation2], %s90
          %s92 = smul.u32 64, %s13
          %s94 = ssub.s32 8192, 8192
          %95 = vsyncadd %s88, %s94
          %s96 = smul.addr %s92, 128
          %s97 = scalar_lea.hbm %s0, %s96
          %s98 = sshll.u32 %s91, 4
          %s99 = int_to_ptr.vmem [resolvable:$true] %s98
          %104 = dma.hbm_to_vmem [thread:$0]  %s97, 8192, %s99, %s88, 128, 128, 8
        $region20: #{tpu_custom_call.1} parent=15 // pred_fallthru
          _
      $region16: #{tpu_custom_call.1} parent=5 // pred_fallthru
        _
      %p105 = scmp.le.s32.totalorder 1, %s13
      %p106 = scmp.lt.s32.totalorder %s13, 3
      %p107 = pnand %p105, %p106
      %p108 = pneg %p107
      // Predicated region
      $region21: #{tpu_custom_call.1} parent=5 // pred_check
        _
      $region22: #{tpu_custom_call.1} parent=5 // pred_check_branch
        %110 = sbr.rel (%p107) target = $region24
      $region23: #{tpu_custom_call.1} parent=5 // pred_region
        %s111 = ssub.s32 %s13, 1
        %s112 = sand.u32 %s26, 1
        %s113 = scalar_lea.sflag [#allocation3], %s112
        %s114 = sand.u32 %s26, 1
        %s115 = smul.addr %s114, 512
        %s116 = scalar_lea.vmem [#allocation2], %s115
        // Predicated region
        $region25: #{tpu_custom_call.1} parent=23 // pred_check
          %p117 = pneg %p39
        $region26: #{tpu_custom_call.1} parent=23 // pred_check_branch
          %119 = sbr.rel (%p117) target = $region28
        $region27: #{tpu_custom_call.1} parent=23 // pred_region
          %120 = dma.done %s113, 8192
        $region28: #{tpu_custom_call.1} parent=23 // pred_fallthru
          _
        %s121 = sand.u32 %s26, 1
        %s122 = scalar_lea.sflag [#allocation3], %s121
        %s123 = sand.u32 %s26, 1
        %s124 = smul.addr %s123, 512
        %s125 = scalar_lea.vmem [#allocation2], %s124
        %p126 = pneg %p39
        %p127 = pneg %p36
        %p128 = pneg %p65
        %p129 = pneg %p62
        %s130 = sand.u32 %s52, 1
        %s131 = scalar_lea.sflag [#allocation4], %s130
        %s132 = sand.u32 %s52, 1
        %s133 = smul.addr %s132, 512
        %s134 = scalar_lea.vmem [#allocation5], %s133
        %s135 = smul.u32 64, %s18
        %s136 = smul.u32 64, %s18
        %v137 = vld [vmem:[%s116] sm:$0xff]
        %v138 = vld [vmem:[%s116 + $0x8] sm:$0xff]
        %v139 = vld [vmem:[%s116 + $0x10] sm:$0xff]
        %v140 = vld [vmem:[%s116 + $0x18] sm:$0xff]
        %v141 = vld [vmem:[%s116 + $0x20] sm:$0xff]
        %v142 = vld [vmem:[%s116 + $0x28] sm:$0xff]
        %v143 = vld [vmem:[%s116 + $0x30] sm:$0xff]
        %v144 = vld [vmem:[%s116 + $0x38] sm:$0xff]
        %v145 = vld [vmem:[%s116 + $0x40] sm:$0xff]
        %v146 = vld [vmem:[%s116 + $0x48] sm:$0xff]
        %v147 = vld [vmem:[%s116 + $0x50] sm:$0xff]
        %v148 = vld [vmem:[%s116 + $0x58] sm:$0xff]
        %v149 = vld [vmem:[%s116 + $0x60] sm:$0xff]
        %v150 = vld [vmem:[%s116 + $0x68] sm:$0xff]
        %v151 = vld [vmem:[%s116 + $0x70] sm:$0xff]
        %v152 = vld [vmem:[%s116 + $0x78] sm:$0xff]
        %v153 = vld [vmem:[%s116 + $0x80] sm:$0xff]
        %v154 = vld [vmem:[%s116 + $0x88] sm:$0xff]
        %v155 = vld [vmem:[%s116 + $0x90] sm:$0xff]
        %v156 = vld [vmem:[%s116 + $0x98] sm:$0xff]
        %v157 = vld [vmem:[%s116 + $0xa0] sm:$0xff]
        %v158 = vld [vmem:[%s116 + $0xa8] sm:$0xff]
        %v159 = vld [vmem:[%s116 + $0xb0] sm:$0xff]
        %v160 = vld [vmem:[%s116 + $0xb8] sm:$0xff]
        %v161 = vld [vmem:[%s116 + $0xc0] sm:$0xff]
        %v162 = vld [vmem:[%s116 + $0xc8] sm:$0xff]
        %v163 = vld [vmem:[%s116 + $0xd0] sm:$0xff]
        %v164 = vld [vmem:[%s116 + $0xd8] sm:$0xff]
        %v165 = vld [vmem:[%s116 + $0xe0] sm:$0xff]
        %v166 = vld [vmem:[%s116 + $0xe8] sm:$0xff]
        %v167 = vld [vmem:[%s116 + $0xf0] sm:$0xff]
        %v168 = vld [vmem:[%s116 + $0xf8] sm:$0xff]
        %v169 = vld [vmem:[%s116 + $0x100] sm:$0xff]
        %v170 = vld [vmem:[%s116 + $0x108] sm:$0xff]
        %v171 = vld [vmem:[%s116 + $0x110] sm:$0xff]
        %v172 = vld [vmem:[%s116 + $0x118] sm:$0xff]
        %v173 = vld [vmem:[%s116 + $0x120] sm:$0xff]
        %v174 = vld [vmem:[%s116 + $0x128] sm:$0xff]
        %v175 = vld [vmem:[%s116 + $0x130] sm:$0xff]
        %v176 = vld [vmem:[%s116 + $0x138] sm:$0xff]
        %v177 = vld [vmem:[%s116 + $0x140] sm:$0xff]
        %v178 = vld [vmem:[%s116 + $0x148] sm:$0xff]
        %v179 = vld [vmem:[%s116 + $0x150] sm:$0xff]
        %v180 = vld [vmem:[%s116 + $0x158] sm:$0xff]
        %v181 = vld [vmem:[%s116 + $0x160] sm:$0xff]
        %v182 = vld [vmem:[%s116 + $0x168] sm:$0xff]
        %v183 = vld [vmem:[%s116 + $0x170] sm:$0xff]
        %v184 = vld [vmem:[%s116 + $0x178] sm:$0xff]
        %v185 = vld [vmem:[%s116 + $0x180] sm:$0xff]
        %v186 = vld [vmem:[%s116 + $0x188] sm:$0xff]
        %v187 = vld [vmem:[%s116 + $0x190] sm:$0xff]
        %v188 = vld [vmem:[%s116 + $0x198] sm:$0xff]
        %v189 = vld [vmem:[%s116 + $0x1a0] sm:$0xff]
        %v190 = vld [vmem:[%s116 + $0x1a8] sm:$0xff]
        %v191 = vld [vmem:[%s116 + $0x1b0] sm:$0xff]
        %v192 = vld [vmem:[%s116 + $0x1b8] sm:$0xff]
        %v193 = vld [vmem:[%s116 + $0x1c0] sm:$0xff]
        %v194 = vld [vmem:[%s116 + $0x1c8] sm:$0xff]
        %v195 = vld [vmem:[%s116 + $0x1d0] sm:$0xff]
        %v196 = vld [vmem:[%s116 + $0x1d8] sm:$0xff]
        %v197 = vld [vmem:[%s116 + $0x1e0] sm:$0xff]
        %v198 = vld [vmem:[%s116 + $0x1e8] sm:$0xff]
        %v199 = vld [vmem:[%s116 + $0x1f0] sm:$0xff]
        %v200 = vld [vmem:[%s116 + $0x1f8] sm:$0xff]
        %201 = vst [vmem:[%s134] sm:$0xff] %v137
        %202 = vst [vmem:[%s134 + $0x8] sm:$0xff] %v138
        %203 = vst [vmem:[%s134 + $0x10] sm:$0xff] %v139
        %204 = vst [vmem:[%s134 + $0x18] sm:$0xff] %v140
        %205 = vst [vmem:[%s134 + $0x20] sm:$0xff] %v141
        %206 = vst [vmem:[%s134 + $0x28] sm:$0xff] %v142
        %207 = vst [vmem:[%s134 + $0x30] sm:$0xff] %v143
        %208 = vst [vmem:[%s134 + $0x38] sm:$0xff] %v144
        %209 = vst [vmem:[%s134 + $0x40] sm:$0xff] %v145
        %210 = vst [vmem:[%s134 + $0x48] sm:$0xff] %v146
        %211 = vst [vmem:[%s134 + $0x50] sm:$0xff] %v147
        %212 = vst [vmem:[%s134 + $0x58] sm:$0xff] %v148
        %213 = vst [vmem:[%s134 + $0x60] sm:$0xff] %v149
        %214 = vst [vmem:[%s134 + $0x68] sm:$0xff] %v150
        %215 = vst [vmem:[%s134 + $0x70] sm:$0xff] %v151
        %216 = vst [vmem:[%s134 + $0x78] sm:$0xff] %v152
        %217 = vst [vmem:[%s134 + $0x80] sm:$0xff] %v153
        %218 = vst [vmem:[%s134 + $0x88] sm:$0xff] %v154
        %219 = vst [vmem:[%s134 + $0x90] sm:$0xff] %v155
        %220 = vst [vmem:[%s134 + $0x98] sm:$0xff] %v156
        %221 = vst [vmem:[%s134 + $0xa0] sm:$0xff] %v157
        %222 = vst [vmem:[%s134 + $0xa8] sm:$0xff] %v158
        %223 = vst [vmem:[%s134 + $0xb0] sm:$0xff] %v159
        %224 = vst [vmem:[%s134 + $0xb8] sm:$0xff] %v160
        %225 = vst [vmem:[%s134 + $0xc0] sm:$0xff] %v161
        %226 = vst [vmem:[%s134 + $0xc8] sm:$0xff] %v162
        %227 = vst [vmem:[%s134 + $0xd0] sm:$0xff] %v163
        %228 = vst [vmem:[%s134 + $0xd8] sm:$0xff] %v164
        %229 = vst [vmem:[%s134 + $0xe0] sm:$0xff] %v165
        %230 = vst [vmem:[%s134 + $0xe8] sm:$0xff] %v166
        %231 = vst [vmem:[%s134 + $0xf0] sm:$0xff] %v167
        %232 = vst [vmem:[%s134 + $0xf8] sm:$0xff] %v168
        %233 = vst [vmem:[%s134 + $0x100] sm:$0xff] %v169
        %234 = vst [vmem:[%s134 + $0x108] sm:$0xff] %v170
        %235 = vst [vmem:[%s134 + $0x110] sm:$0xff] %v171
        %236 = vst [vmem:[%s134 + $0x118] sm:$0xff] %v172
        %237 = vst [vmem:[%s134 + $0x120] sm:$0xff] %v173
        %238 = vst [vmem:[%s134 + $0x128] sm:$0xff] %v174
        %239 = vst [vmem:[%s134 + $0x130] sm:$0xff] %v175
        %240 = vst [vmem:[%s134 + $0x138] sm:$0xff] %v176
        %241 = vst [vmem:[%s134 + $0x140] sm:$0xff] %v177
        %242 = vst [vmem:[%s134 + $0x148] sm:$0xff] %v178
        %243 = vst [vmem:[%s134 + $0x150] sm:$0xff] %v179
        %244 = vst [vmem:[%s134 + $0x158] sm:$0xff] %v180
        %245 = vst [vmem:[%s134 + $0x160] sm:$0xff] %v181
        %246 = vst [vmem:[%s134 + $0x168] sm:$0xff] %v182
        %247 = vst [vmem:[%s134 + $0x170] sm:$0xff] %v183
        %248 = vst [vmem:[%s134 + $0x178] sm:$0xff] %v184
        %249 = vst [vmem:[%s134 + $0x180] sm:$0xff] %v185
        %250 = vst [vmem:[%s134 + $0x188] sm:$0xff] %v186
        %251 = vst [vmem:[%s134 + $0x190] sm:$0xff] %v187
        %252 = vst [vmem:[%s134 + $0x198] sm:$0xff] %v188
        %253 = vst [vmem:[%s134 + $0x1a0] sm:$0xff] %v189
        %254 = vst [vmem:[%s134 + $0x1a8] sm:$0xff] %v190
        %255 = vst [vmem:[%s134 + $0x1b0] sm:$0xff] %v191
        %256 = vst [vmem:[%s134 + $0x1b8] sm:$0xff] %v192
        %257 = vst [vmem:[%s134 + $0x1c0] sm:$0xff] %v193
        %258 = vst [vmem:[%s134 + $0x1c8] sm:$0xff] %v194
        %259 = vst [vmem:[%s134 + $0x1d0] sm:$0xff] %v195
        %260 = vst [vmem:[%s134 + $0x1d8] sm:$0xff] %v196
        %261 = vst [vmem:[%s134 + $0x1e0] sm:$0xff] %v197
        %262 = vst [vmem:[%s134 + $0x1e8] sm:$0xff] %v198
        %263 = vst [vmem:[%s134 + $0x1f0] sm:$0xff] %v199
        %264 = vst [vmem:[%s134 + $0x1f8] sm:$0xff] %v200
        %s265 = sand.u32 %s52, 1
        %s266 = scalar_lea.sflag [#allocation4], %s265
        %s267 = sand.u32 %s52, 1
        %s268 = smul.addr %s267, 512
        %s269 = scalar_lea.vmem [#allocation5], %s268
        // Predicated region
        $region29: #{tpu_custom_call.1} parent=23 // pred_check
          %p270 = pneg %p62
        $region30: #{tpu_custom_call.1} parent=23 // pred_check_branch
          %272 = sbr.rel (%p270) target = $region32
        $region31: #{tpu_custom_call.1} parent=23 // pred_region
          %s273 = smul.u32 64, %s18
          %s275 = ssub.s32 8192, 8192
          %276 = vsyncadd %s266, %s275
          %s277 = smul.addr %s273, 128
          %s278 = scalar_lea.hbm %s1, %s277
          %s279 = sshll.u32 %s269, 4
          %s280 = int_to_ptr.vmem [resolvable:$true] %s279
          %285 = dma.vmem_to_hbm [thread:$0]  %s280, 8192, %s278, %s266, 128, 128, 8
        $region32: #{tpu_custom_call.1} parent=23 // pred_fallthru
          _
      $region24: #{tpu_custom_call.1} parent=5 // pred_fallthru
        _
      %p286 = scmp.le.s32.totalorder 2, %s13
      // Predicated region
      $region33: #{tpu_custom_call.1} parent=5 // pred_check
        %p287 = pneg %p286
      $region34: #{tpu_custom_call.1} parent=5 // pred_check_branch
        %289 = sbr.rel (%p287) target = $region36
      $region35: #{tpu_custom_call.1} parent=5 // pred_region
        %s290 = ssub.s32 %s13, 2
        // Predicated region
        $region37: #{tpu_custom_call.1} parent=35 // pred_check
          %p291 = pneg %p68
        $region38: #{tpu_custom_call.1} parent=35 // pred_check_branch
          %293 = sbr.rel (%p291) target = $region40
        $region39: #{tpu_custom_call.1} parent=35 // pred_region
          %s294 = sand.u32 %s53, 1
          %s295 = scalar_lea.sflag [#allocation4], %s294
          %s296 = sand.u32 %s53, 1
          %s297 = smul.addr %s296, 512
          %s298 = scalar_lea.vmem [#allocation5], %s297
          %299 = dma.done %s295, 8192
        $region40: #{tpu_custom_call.1} parent=35 // pred_fallthru
          _
      $region36: #{tpu_custom_call.1} parent=5 // pred_fallthru
        _
    $region6: #{tpu_custom_call.1} parent=1 // loop_footer
      %s17 = sadd.s32 1, %s13
    $region7: #{tpu_custom_call.1} parent=1 // loop_footer_branch
      %12 = sbr.rel target = $region3
    $region8: #{tpu_custom_call.1} parent=1 // loop_exit
      _
    %300 = vsyncpa [#allocation3], 1
    %s301 = scalar_lea.sflag [#allocation3], 1
    %302 = vsyncpa %s301, 1
    %303 = vsyncpa [#allocation4], 1
    %s304 = scalar_lea.sflag [#allocation4], 1
    %305 = vsyncpa %s304, 1

</llo_original>
